<compile_context>
chip_gen: v5e
topology: v5e:2x2
jax: 0.10.0
libtpu: 0.0.40
codegen_flags: <defaults>
</compile_context>

<pallas_src>
import functools

import jax
import jax.numpy as jnp
from jax.experimental import pallas as pl
from jax.experimental.pallas import tpu as pltpu


def _sampler_kernel(lp_ref, rand_ref, logsamps_ref, logprob_ref, *, inv_conc):
    # lp_ref:       (1, C, th, tw)  log-probabilities (NCHW block)
    # rand_ref:     (1, 1, th, tw)  uniform random per spatial position
    # logsamps_ref: (1, C, th, tw)  log of the one-hot sample (0 / -inf)
    # logprob_ref:  (1, 1, th, tw)  selected log-probability / concentration
    C = lp_ref.shape[1]

    rand = rand_ref[0, 0].astype(jnp.float32)          # (th, tw)
    cum = jnp.zeros_like(rand)                         # running cumsum of exp(lp)
    logprob = jnp.zeros_like(rand)
    prev_ge = None

    zero = jnp.float32(0.0)
    neg_inf = jnp.float32(-jnp.inf)

    # Unrolled loop over channels: C-1 vector adds on full (th, tw) slabs.
    for c in range(C):
        lpc = lp_ref[0, c].astype(jnp.float32)         # (th, tw)
        cum = cum + jnp.exp(lpc)
        ge = cum >= rand                               # torch: samps = cumprob >= rand
        if c == C - 1:
            # Clamp: guarantee a selection even if fp rounding left cum < rand.
            ge = jnp.ones_like(ge)
        # torch: samps[1:] ^= samps[:-1]  (XOR with the *original* previous ge)
        samp_c = ge if prev_ge is None else jnp.logical_xor(ge, prev_ge)
        prev_ge = ge

        # samps.log() is exactly 0 where selected, -inf elsewhere.
        logsamps_ref[0, c] = jnp.where(samp_c, zero, neg_inf)
        # logprob = sum_c samps * lp with NaN (0 * -inf) -> 0.
        logprob = logprob + jnp.where(samp_c, lpc, zero)

    logprob_ref[0, 0] = logprob * inv_conc


def _largest_divisor_tile(extent, quantum, cap):
    """Largest divisor of `extent` that is a multiple of `quantum` and <= cap.

    Falls back to the full extent (always a legal block dim) if none exists.
    """
    if extent % quantum != 0:
        return extent
    best = None
    t = quantum
    limit = min(extent, max(quantum, cap))
    while t <= limit:
        if extent % t == 0:
            best = t
        t += quantum
    return best if best is not None else extent


def sampler_forward(inputs, manualrand=None, mode="likelihood",
                    concentration=1.0, key=None):
    """inputs: (B, C, H, W) log-probabilities (NCHW, categorical axis = 1).

    Returns (log(samps), logprob) as in Sampler.forward.
    """
    if mode in ("concentrated_likelihood", 7):
        concentration = 1.0
    elif mode not in ("likelihood", 0):
        raise NotImplementedError(f"mode {mode!r} not translated")

    B, C, H, W = inputs.shape
    lp = inputs.astype(jnp.float32)

    if manualrand is None:
        if key is None:
            key = jax.random.PRNGKey(0)
        manualrand = jax.random.uniform(key, (B, 1, H, W), dtype=jnp.float32)
    rand = manualrand.astype(jnp.float32)

    # --- tile selection ------------------------------------------------------
    # Last two block dims must be multiples of (8, 128) or equal the full H/W.
    # Budget ~4 MiB of blocks per grid step (~8 MiB with double buffering):
    # comfortably inside the default scoped VMEM on v5e/v6e/v7x.
    budget_bytes = 4 * 1024 * 1024
    tw = _largest_divisor_tile(W, 128, 1024)
    bytes_per_row = (2 * C + 2) * tw * 4               # lp + logsamps + rand + logprob
    max_th = max(8, budget_bytes // max(bytes_per_row, 1))
    th = _largest_divisor_tile(H, 8, max_th)

    grid = (B, H // th, W // tw)

    kern = functools.partial(_sampler_kernel, inv_conc=1.0 / float(concentration))
    logsamps, logprob = pl.pallas_call(
        kern,
        out_shape=(jax.ShapeDtypeStruct((B, C, H, W), jnp.float32),
                   jax.ShapeDtypeStruct((B, 1, H, W), jnp.float32)),
        grid_spec=pltpu.PrefetchScalarGridSpec(
            num_scalar_prefetch=0,
            grid=grid,
            in_specs=[
                pl.BlockSpec((1, C, th, tw), lambda b, i, j: (b, 0, i, j)),
                pl.BlockSpec((1, 1, th, tw), lambda b, i, j: (b, 0, i, j)),
            ],
            out_specs=[
                pl.BlockSpec((1, C, th, tw), lambda b, i, j: (b, 0, i, j)),
                pl.BlockSpec((1, 1, th, tw), lambda b, i, j: (b, 0, i, j)),
            ],
        ),
        compiler_params=pltpu.CompilerParams(
            dimension_semantics=("parallel", "parallel", "parallel")),
    )(lp, rand)

    return logsamps, logprob


if __name__ == "__main__":
    B, C, H, W = 2, 4, 16, 16
    key = jax.random.PRNGKey(0)
    k_logits, k_rand = jax.random.split(key)

    # Deterministic "parameter": the Sampler's concentration parameter (init = 1.0).
    concentration = 1.0

    # Normalized log-probabilities along the channel axis (as the module expects).
    logits = jax.random.normal(k_logits, (B, C, H, W), dtype=jnp.float32)
    lp = jax.nn.log_softmax(logits, axis=1)

    manualrand = jax.random.uniform(k_rand, (B, 1, H, W), dtype=jnp.float32)

    log_samps, logprob = sampler_forward(lp, manualrand=manualrand,
                                         mode="likelihood",
                                         concentration=concentration)
    jax.block_until_ready((log_samps, logprob))

    # Sanity checks: samps = exp(log_samps) is one-hot along the channel axis;
    # logprob equals the log-probability of the selected channel / concentration.
    samps = jnp.exp(log_samps)
    assert log_samps.shape == (B, C, H, W)
    assert logprob.shape == (B, 1, H, W)
    assert bool(jnp.allclose(samps.sum(axis=1), 1.0))
    ref_logprob = jnp.sum(jnp.where(samps > 0, lp, 0.0), axis=1, keepdims=True)
    assert bool(jnp.allclose(logprob, ref_logprob / concentration, atol=1e-5))

    # Cross-check the one-hot selection against a pure-JAX reference of the
    # torch XOR/cumsum trick.
    p = jnp.exp(lp)
    cum = jnp.cumsum(p, axis=1)
    ge = cum >= manualrand
    prev = jnp.concatenate([jnp.zeros_like(ge[:, :1]), ge[:, :-1]], axis=1)
    ref_samps = jnp.logical_xor(ge, prev).astype(jnp.float32)
    # (Only compare where the reference itself selected something; the kernel
    #  additionally clamps the degenerate all-False corner.)
    sel_ok = ref_samps.sum(axis=1, keepdims=True) > 0
    assert bool(jnp.all(jnp.where(sel_ok, ref_samps == samps, True)))

    print("KERNEL_OK")
</pallas_src>

<mosaic_0001>
module attributes {stable_mosaic.version = 11 : i64} {
  func.func @_sampler_kernel(%arg0: i32, %arg1: i32, %arg2: i32, %arg3: memref<1x4x16x16xf32, #tpu.memory_space<vmem>>, %arg4: memref<1x1x16x16xf32, #tpu.memory_space<vmem>>, %arg5: memref<1x4x16x16xf32, #tpu.memory_space<vmem>>, %arg6: memref<1x1x16x16xf32, #tpu.memory_space<vmem>>) attributes {dimension_semantics = [#tpu.dimension_semantics<parallel>, #tpu.dimension_semantics<parallel>, #tpu.dimension_semantics<parallel>], iteration_bounds = array<i64: 2, 1, 1>, scalar_prefetch = 0 : i64, scratch_operands = 0 : i64, tpu.core_type = #tpu.core_type<tc>, window_params = [{transform_indices = @transform_0, window_bounds = array<i64: 1, 4, 16, 16>}, {transform_indices = @transform_1, window_bounds = array<i64: 1, 1, 16, 16>}, {transform_indices = @transform_2, window_bounds = array<i64: 1, 4, 16, 16>}, {transform_indices = @transform_3, window_bounds = array<i64: 1, 1, 16, 16>}]} {
    %c0 = arith.constant 0 : index
    %c0_0 = arith.constant 0 : index
    %c0_1 = arith.constant 0 : index
    %c0_2 = arith.constant 0 : index
    %0 = vector.load %arg4[%c0, %c0_0, %c0_1, %c0_2] : memref<1x1x16x16xf32, #tpu.memory_space<vmem>>, vector<1x1x16x16xf32>
    %1 = vector.shape_cast %0 : vector<1x1x16x16xf32> to vector<16x16xf32>
    %cst = arith.constant 0.000000e+00 : f32
    %2 = vector.broadcast %cst : f32 to vector<16x16xf32>
    %cst_3 = arith.constant 0.000000e+00 : f32
    %3 = vector.broadcast %cst_3 : f32 to vector<16x16xf32>
    %c0_4 = arith.constant 0 : index
    %c0_5 = arith.constant 0 : index
    %c0_6 = arith.constant 0 : index
    %c0_7 = arith.constant 0 : index
    %4 = vector.load %arg3[%c0_4, %c0_5, %c0_6, %c0_7] : memref<1x4x16x16xf32, #tpu.memory_space<vmem>>, vector<1x1x16x16xf32>
    %5 = vector.shape_cast %4 : vector<1x1x16x16xf32> to vector<16x16xf32>
    %6 = math.exp %5 : vector<16x16xf32>
    %7 = arith.addf %2, %6 : vector<16x16xf32>
    %8 = arith.cmpf oge, %7, %1 : vector<16x16xf32>
    %cst_8 = arith.constant 0.000000e+00 : f32
    %cst_9 = arith.constant 0xFF800000 : f32
    %9 = vector.broadcast %cst_8 : f32 to vector<16x16xf32>
    %10 = vector.broadcast %cst_9 : f32 to vector<16x16xf32>
    %11 = arith.select %8, %9, %10 : vector<16x16xi1>, vector<16x16xf32>
    %c0_10 = arith.constant 0 : index
    %c0_11 = arith.constant 0 : index
    %c0_12 = arith.constant 0 : index
    %c0_13 = arith.constant 0 : index
    %12 = vector.load %arg5[%c0_10, %c0_11, %c0_12, %c0_13] : memref<1x4x16x16xf32, #tpu.memory_space<vmem>>, vector<1x1x16x16xf32>
    %13 = vector.shape_cast %12 : vector<1x1x16x16xf32> to vector<16x16xf32>
    %14 = vector.shape_cast %11 : vector<16x16xf32> to vector<1x1x16x16xf32>
    tpu.vector_store %arg5[%c0_10, %c0_11, %c0_12, %c0_13], %14 {strides = array<i32>} : memref<1x4x16x16xf32, #tpu.memory_space<vmem>>, vector<1x1x16x16xf32>,
    %cst_14 = arith.constant 0.000000e+00 : f32
    %15 = vector.broadcast %cst_14 : f32 to vector<16x16xf32>
    %16 = arith.select %8, %5, %15 : vector<16x16xi1>, vector<16x16xf32>
    %17 = arith.addf %3, %16 : vector<16x16xf32>
    %c0_15 = arith.constant 0 : index
    %c1 = arith.constant 1 : index
    %c0_16 = arith.constant 0 : index
    %c0_17 = arith.constant 0 : index
    %18 = vector.load %arg3[%c0_15, %c1, %c0_16, %c0_17] : memref<1x4x16x16xf32, #tpu.memory_space<vmem>>, vector<1x1x16x16xf32>
    %19 = vector.shape_cast %18 : vector<1x1x16x16xf32> to vector<16x16xf32>
    %20 = math.exp %19 : vector<16x16xf32>
    %21 = arith.addf %7, %20 : vector<16x16xf32>
    %22 = arith.cmpf oge, %21, %1 : vector<16x16xf32>
    %23 = arith.xori %22, %8 : vector<16x16xi1>
    %cst_18 = arith.constant 0.000000e+00 : f32
    %cst_19 = arith.constant 0xFF800000 : f32
    %24 = vector.broadcast %cst_18 : f32 to vector<16x16xf32>
    %25 = vector.broadcast %cst_19 : f32 to vector<16x16xf32>
    %26 = arith.select %23, %24, %25 : vector<16x16xi1>, vector<16x16xf32>
    %c0_20 = arith.constant 0 : index
    %c1_21 = arith.constant 1 : index
    %c0_22 = arith.constant 0 : index
    %c0_23 = arith.constant 0 : index
    %27 = vector.load %arg5[%c0_20, %c1_21, %c0_22, %c0_23] : memref<1x4x16x16xf32, #tpu.memory_space<vmem>>, vector<1x1x16x16xf32>
    %28 = vector.shape_cast %27 : vector<1x1x16x16xf32> to vector<16x16xf32>
    %29 = vector.shape_cast %26 : vector<16x16xf32> to vector<1x1x16x16xf32>
    tpu.vector_store %arg5[%c0_20, %c1_21, %c0_22, %c0_23], %29 {strides = array<i32>} : memref<1x4x16x16xf32, #tpu.memory_space<vmem>>, vector<1x1x16x16xf32>,
    %cst_24 = arith.constant 0.000000e+00 : f32
    %30 = vector.broadcast %cst_24 : f32 to vector<16x16xf32>
    %31 = arith.select %23, %19, %30 : vector<16x16xi1>, vector<16x16xf32>
    %32 = arith.addf %17, %31 : vector<16x16xf32>
    %c0_25 = arith.constant 0 : index
    %c2 = arith.constant 2 : index
    %c0_26 = arith.constant 0 : index
    %c0_27 = arith.constant 0 : index
    %33 = vector.load %arg3[%c0_25, %c2, %c0_26, %c0_27] : memref<1x4x16x16xf32, #tpu.memory_space<vmem>>, vector<1x1x16x16xf32>
    %34 = vector.shape_cast %33 : vector<1x1x16x16xf32> to vector<16x16xf32>
    %35 = math.exp %34 : vector<16x16xf32>
    %36 = arith.addf %21, %35 : vector<16x16xf32>
    %37 = arith.cmpf oge, %36, %1 : vector<16x16xf32>
    %38 = arith.xori %37, %22 : vector<16x16xi1>
    %cst_28 = arith.constant 0.000000e+00 : f32
    %cst_29 = arith.constant 0xFF800000 : f32
    %39 = vector.broadcast %cst_28 : f32 to vector<16x16xf32>
    %40 = vector.broadcast %cst_29 : f32 to vector<16x16xf32>
    %41 = arith.select %38, %39, %40 : vector<16x16xi1>, vector<16x16xf32>
    %c0_30 = arith.constant 0 : index
    %c2_31 = arith.constant 2 : index
    %c0_32 = arith.constant 0 : index
    %c0_33 = arith.constant 0 : index
    %42 = vector.load %arg5[%c0_30, %c2_31, %c0_32, %c0_33] : memref<1x4x16x16xf32, #tpu.memory_space<vmem>>, vector<1x1x16x16xf32>
    %43 = vector.shape_cast %42 : vector<1x1x16x16xf32> to vector<16x16xf32>
    %44 = vector.shape_cast %41 : vector<16x16xf32> to vector<1x1x16x16xf32>
    tpu.vector_store %arg5[%c0_30, %c2_31, %c0_32, %c0_33], %44 {strides = array<i32>} : memref<1x4x16x16xf32, #tpu.memory_space<vmem>>, vector<1x1x16x16xf32>,
    %cst_34 = arith.constant 0.000000e+00 : f32
    %45 = vector.broadcast %cst_34 : f32 to vector<16x16xf32>
    %46 = arith.select %38, %34, %45 : vector<16x16xi1>, vector<16x16xf32>
    %47 = arith.addf %32, %46 : vector<16x16xf32>
    %c0_35 = arith.constant 0 : index
    %c3 = arith.constant 3 : index
    %c0_36 = arith.constant 0 : index
    %c0_37 = arith.constant 0 : index
    %48 = vector.load %arg3[%c0_35, %c3, %c0_36, %c0_37] : memref<1x4x16x16xf32, #tpu.memory_space<vmem>>, vector<1x1x16x16xf32>
    %49 = vector.shape_cast %48 : vector<1x1x16x16xf32> to vector<16x16xf32>
    %true = arith.constant true
    %50 = vector.broadcast %true : i1 to vector<16x16xi1>
    %51 = arith.xori %50, %37 : vector<16x16xi1>
    %cst_38 = arith.constant 0.000000e+00 : f32
    %cst_39 = arith.constant 0xFF800000 : f32
    %52 = vector.broadcast %cst_38 : f32 to vector<16x16xf32>
    %53 = vector.broadcast %cst_39 : f32 to vector<16x16xf32>
    %54 = arith.select %51, %52, %53 : vector<16x16xi1>, vector<16x16xf32>
    %c0_40 = arith.constant 0 : index
    %c3_41 = arith.constant 3 : index
    %c0_42 = arith.constant 0 : index
    %c0_43 = arith.constant 0 : index
    %55 = vector.load %arg5[%c0_40, %c3_41, %c0_42, %c0_43] : memref<1x4x16x16xf32, #tpu.memory_space<vmem>>, vector<1x1x16x16xf32>
    %56 = vector.shape_cast %55 : vector<1x1x16x16xf32> to vector<16x16xf32>
    %57 = vector.shape_cast %54 : vector<16x16xf32> to vector<1x1x16x16xf32>
    tpu.vector_store %arg5[%c0_40, %c3_41, %c0_42, %c0_43], %57 {strides = array<i32>} : memref<1x4x16x16xf32, #tpu.memory_space<vmem>>, vector<1x1x16x16xf32>,
    %cst_44 = arith.constant 0.000000e+00 : f32
    %58 = vector.broadcast %cst_44 : f32 to vector<16x16xf32>
    %59 = arith.select %51, %49, %58 : vector<16x16xi1>, vector<16x16xf32>
    %60 = arith.addf %47, %59 : vector<16x16xf32>
    %cst_45 = arith.constant 1.000000e+00 : f32
    %61 = vector.broadcast %cst_45 : f32 to vector<16x16xf32>
    %62 = arith.mulf %60, %61 : vector<16x16xf32>
    %c0_46 = arith.constant 0 : index
    %c0_47 = arith.constant 0 : index
    %c0_48 = arith.constant 0 : index
    %c0_49 = arith.constant 0 : index
    %63 = vector.load %arg6[%c0_46, %c0_47, %c0_48, %c0_49] : memref<1x1x16x16xf32, #tpu.memory_space<vmem>>, vector<1x1x16x16xf32>
    %64 = vector.shape_cast %63 : vector<1x1x16x16xf32> to vector<16x16xf32>
    %65 = vector.shape_cast %62 : vector<16x16xf32> to vector<1x1x16x16xf32>
    tpu.vector_store %arg6[%c0_46, %c0_47, %c0_48, %c0_49], %65 {strides = array<i32>} : memref<1x1x16x16xf32, #tpu.memory_space<vmem>>, vector<1x1x16x16xf32>,
    return
  }
  func.func @transform_0(%arg0: i32, %arg1: i32, %arg2: i32) -> (i32, i32, i32, i32) {
    %c0_i32 = arith.constant 0 : i32
    %c0_i32_0 = arith.constant 0 : i32
    return %arg0, %c0_i32, %arg1, %arg2 : i32, i32, i32, i32
  }
  func.func @transform_1(%arg0: i32, %arg1: i32, %arg2: i32) -> (i32, i32, i32, i32) {
    %c0_i32 = arith.constant 0 : i32
    %c0_i32_0 = arith.constant 0 : i32
    return %arg0, %c0_i32, %arg1, %arg2 : i32, i32, i32, i32
  }
  func.func @transform_2(%arg0: i32, %arg1: i32, %arg2: i32) -> (i32, i32, i32, i32) {
    %c0_i32 = arith.constant 0 : i32
    %c0_i32_0 = arith.constant 0 : i32
    return %arg0, %c0_i32, %arg1, %arg2 : i32, i32, i32, i32
  }
  func.func @transform_3(%arg0: i32, %arg1: i32, %arg2: i32) -> (i32, i32, i32, i32) {
    %c0_i32 = arith.constant 0 : i32
    %c0_i32_0 = arith.constant 0 : i32
    return %arg0, %c0_i32, %arg1, %arg2 : i32, i32, i32, i32
  }
}

</mosaic_0001>

<llo_original>
// kernel: tpu_custom_call.1
$region0: #{tpu_custom_call.1}
  #allocation0 [shape = 'u32[]', space=smem, size = 0x4, offset = 0x4, fixed_abs, tag = 'smem constant byte address 0x4 - core index']
  #allocation1 [shape = 'u32[72,128]{1,0:T(1,128)}', space=vmem, size = 0x9000, scoped, tag = 'internal scratch']
  %s0 = inlined_call_operand.hbm [shape: f32[2,4,16,16], index: 0, kind: input, shape index: {}]
  %s1 = inlined_call_operand.hbm [shape: f32[2,1,16,16], index: 1, kind: input, shape index: {}]
  %s2 = inlined_call_operand.hbm [shape: f32[2,4,16,16], index: 2, kind: output, shape index: {0}]
  %s3 = inlined_call_operand.hbm [shape: f32[2,1,16,16], index: 3, kind: output, shape index: {1}]
  %4 = xla_tuple %s2, %s3
  %s5 = sld [smem:[#allocation0]]
  $region57: #{tpu_custom_call.1} parent=0
    _
  %s7 = ssub.s32 1, %s5
  %s8 = scalar_select 0, %s7, %s5
  $region1: #{tpu_custom_call.1} parent=0
    #allocation2 [shape = 'u8[65536]{0}', space=vmem, size = 0x10000, scoped, tag = 'input window, operand 0']
    #allocation3 [shape = 's32[2]{0}', space=sflag, size = 0x8, scoped, tag = 'scoped memory for tpu_custom_call.1']
    #allocation4 [shape = 's32[2]{0}', space=sflag, size = 0x8, scoped, tag = 'scoped memory for tpu_custom_call.1']
    #allocation5 [shape = 'u8[16384]{0}', space=vmem, size = 0x4000, scoped, tag = 'input window, operand 1']
    #allocation6 [shape = 's32[2]{0}', space=sflag, size = 0x8, scoped, tag = 'scoped memory for tpu_custom_call.1']
    #allocation7 [shape = 'u8[65536]{0}', space=vmem, size = 0x10000, scoped, tag = 'output window, operand 0']
    #allocation8 [shape = 'u8[16384]{0}', space=vmem, size = 0x4000, scoped, tag = 'output window, operand 1']
    #allocation9 [shape = 's32[2]{0}', space=sflag, size = 0x8, scoped, tag = 'scoped memory for tpu_custom_call.1']
    %9 = vsyncpa [#allocation3], 0
    %s10 = scalar_lea.sflag [#allocation3], 1
    %11 = vsyncpa %s10, 0
    %12 = vsyncpa [#allocation6], 0
    %s13 = scalar_lea.sflag [#allocation6], 1
    %14 = vsyncpa %s13, 0
    %15 = vsyncpa [#allocation4], 0
    %s16 = scalar_lea.sflag [#allocation4], 1
    %17 = vsyncpa %s16, 0
    %18 = vsyncpa [#allocation9], 0
    %s19 = scalar_lea.sflag [#allocation9], 1
    %20 = vsyncpa %s19, 0
    loop: start=0, step=1, limit=4
    $region2: #{tpu_custom_call.1} parent=1 // loop_pre_header
      _
    $region3: #{tpu_custom_call.1} parent=1 // loop_header
      %s22 = sphi 0, %s26
      %p23 = scmp.ge.s32.totalorder %s22, 4
      %s29 = sphi 0, %s48
      %s30 = sphi 0, %s44
      %s31 = sphi 0, %s40
      %s32 = sphi 0, %s29
      %s33 = sphi 0, %s30
      %s34 = sphi 0, %s31
      %s35 = sphi 0, %s32
      %s36 = sphi 0, %s33
      %s37 = sphi 0, %s34
      %s55 = sphi 0, %s57
      %s58 = sphi 0, %s55
      %s59 = sphi 0, %s58
      %s75 = sphi 0, %s59
      %s85 = sphi 0, %s87
      %s88 = sphi 0, %s85
      %s89 = sphi 0, %s88
      %s105 = sphi 0, %s89
      %s115 = sphi 0, %s117
      %s118 = sphi 0, %s115
      %s119 = sphi 0, %s118
      %s135 = sphi 0, %s119
      %s145 = sphi 0, %s147
      %s148 = sphi 0, %s145
      %s149 = sphi 0, %s148
      %s165 = sphi 0, %s149
    $region4: #{tpu_custom_call.1} parent=1 // loop_header_branch
      %25 = sbr.rel (%p23) target = $region8
    $region5: #{tpu_custom_call.1} parent=1 // loop_body
      %s27 = ssub.s32 %s22, 1
      %s28 = ssub.s32 %s22, 2
      %s38 = sadd.s32 1, %s31
      %p39 = scmp.ge.s32.totalorder %s38, 1
      %s40 = scalar_select %p39, 0, %s38
      %s41 = sadd.s32 1, %s30
      %s42 = scalar_select %p39, %s41, %s30
      %p43 = scmp.ge.s32.totalorder %s42, 1
      %s44 = scalar_select %p43, 0, %s42
      %s45 = sadd.s32 1, %s29
      %s46 = scalar_select %p43, %s45, %s29
      %p47 = scmp.ge.s32.totalorder %s46, 2
      %s48 = scalar_select %p47, 0, %s46
      %s49 = ssub.s32 %s29, %s48
      %s50 = ssub.s32 %s30, %s44
      %s51 = sor.u32 %s49, %s50
      %s52 = ssub.s32 %s31, %s40
      %s53 = sor.u32 %s51, %s52
      %p54 = scmp.eq.s32.totalorder %s53, 0
      %s56 = sadd.s32 %s55, 1
      %s57 = scalar_select %p54, %s55, %s56
      %p60 = pneg %p54
      %p61 = scmp.eq.s32.totalorder %s22, 1
      %p62 = por %p60, %p61
      %p63 = scmp.ne.s32.totalorder %s55, %s58
      %p64 = scmp.eq.s32.totalorder %s22, 0
      %p65 = por %p63, %p64
      %p66 = scmp.ne.s32.totalorder %s55, %s58
      %p67 = scmp.eq.s32.totalorder %s27, 1
      %p68 = por %p66, %p67
      %p69 = scmp.ne.s32.totalorder %s58, %s59
      %p70 = scmp.eq.s32.totalorder %s27, 0
      %p71 = por %p69, %p70
      %p72 = scmp.ne.s32.totalorder %s58, %s59
      %p73 = scmp.eq.s32.totalorder %s28, 1
      %p74 = por %p72, %p73
      %p76 = scmp.ne.s32.totalorder %s59, %s75
      %p77 = scmp.eq.s32.totalorder %s28, 0
      %p78 = por %p76, %p77
      %s79 = ssub.s32 %s29, %s48
      %s80 = ssub.s32 %s30, %s44
      %s81 = sor.u32 %s79, %s80
      %s82 = ssub.s32 %s31, %s40
      %s83 = sor.u32 %s81, %s82
      %p84 = scmp.eq.s32.totalorder %s83, 0
      %s86 = sadd.s32 %s85, 1
      %s87 = scalar_select %p84, %s85, %s86
      %p90 = pneg %p84
      %p91 = scmp.eq.s32.totalorder %s22, 1
      %p92 = por %p90, %p91
      %p93 = scmp.ne.s32.totalorder %s85, %s88
      %p94 = scmp.eq.s32.totalorder %s22, 0
      %p95 = por %p93, %p94
      %p96 = scmp.ne.s32.totalorder %s85, %s88
      %p97 = scmp.eq.s32.totalorder %s27, 1
      %p98 = por %p96, %p97
      %p99 = scmp.ne.s32.totalorder %s88, %s89
      %p100 = scmp.eq.s32.totalorder %s27, 0
      %p101 = por %p99, %p100
      %p102 = scmp.ne.s32.totalorder %s88, %s89
      %p103 = scmp.eq.s32.totalorder %s28, 1
      %p104 = por %p102, %p103
      %p106 = scmp.ne.s32.totalorder %s89, %s105
      %p107 = scmp.eq.s32.totalorder %s28, 0
      %p108 = por %p106, %p107
      %s109 = ssub.s32 %s29, %s48
      %s110 = ssub.s32 %s30, %s44
      %s111 = sor.u32 %s109, %s110
      %s112 = ssub.s32 %s31, %s40
      %s113 = sor.u32 %s111, %s112
      %p114 = scmp.eq.s32.totalorder %s113, 0
      %s116 = sadd.s32 %s115, 1
      %s117 = scalar_select %p114, %s115, %s116
      %p120 = pneg %p114
      %p121 = scmp.eq.s32.totalorder %s22, 1
      %p122 = por %p120, %p121
      %p123 = scmp.ne.s32.totalorder %s115, %s118
      %p124 = scmp.eq.s32.totalorder %s22, 0
      %p125 = por %p123, %p124
      %p126 = scmp.ne.s32.totalorder %s115, %s118
      %p127 = scmp.eq.s32.totalorder %s27, 1
      %p128 = por %p126, %p127
      %p129 = scmp.ne.s32.totalorder %s118, %s119
      %p130 = scmp.eq.s32.totalorder %s27, 0
      %p131 = por %p129, %p130
      %p132 = scmp.ne.s32.totalorder %s118, %s119
      %p133 = scmp.eq.s32.totalorder %s28, 1
      %p134 = por %p132, %p133
      %p136 = scmp.ne.s32.totalorder %s119, %s135
      %p137 = scmp.eq.s32.totalorder %s28, 0
      %p138 = por %p136, %p137
      %s139 = ssub.s32 %s29, %s48
      %s140 = ssub.s32 %s30, %s44
      %s141 = sor.u32 %s139, %s140
      %s142 = ssub.s32 %s31, %s40
      %s143 = sor.u32 %s141, %s142
      %p144 = scmp.eq.s32.totalorder %s143, 0
      %s146 = sadd.s32 %s145, 1
      %s147 = scalar_select %p144, %s145, %s146
      %p150 = pneg %p144
      %p151 = scmp.eq.s32.totalorder %s22, 1
      %p152 = por %p150, %p151
      %p153 = scmp.ne.s32.totalorder %s145, %s148
      %p154 = scmp.eq.s32.totalorder %s22, 0
      %p155 = por %p153, %p154
      %p156 = scmp.ne.s32.totalorder %s145, %s148
      %p157 = scmp.eq.s32.totalorder %s27, 1
      %p158 = por %p156, %p157
      %p159 = scmp.ne.s32.totalorder %s148, %s149
      %p160 = scmp.eq.s32.totalorder %s27, 0
      %p161 = por %p159, %p160
      %p162 = scmp.ne.s32.totalorder %s148, %s149
      %p163 = scmp.eq.s32.totalorder %s28, 1
      %p164 = por %p162, %p163
      %p166 = scmp.ne.s32.totalorder %s149, %s165
      %p167 = scmp.eq.s32.totalorder %s28, 0
      %p168 = por %p166, %p167
      %p169 = scmp.le.s32.totalorder 1, %s22
      %p170 = scmp.lt.s32.totalorder %s22, 3
      %p171 = pnand %p169, %p170
      %p172 = pneg %p171
      // Predicated region
      $region9: #{tpu_custom_call.1} parent=5 // pred_check
        _
      $region10: #{tpu_custom_call.1} parent=5 // pred_check_branch
        %174 = sbr.rel (%p171) target = $region12
      $region11: #{tpu_custom_call.1} parent=5 // pred_region
        %s175 = ssub.s32 %s22, 1
      $region12: #{tpu_custom_call.1} parent=5 // pred_fallthru
        _
      %p176 = scmp.lt.s32.totalorder %s22, 2
      // Predicated region
      $region13: #{tpu_custom_call.1} parent=5 // pred_check
        %p177 = pneg %p176
      $region14: #{tpu_custom_call.1} parent=5 // pred_check_branch
        %179 = sbr.rel (%p177) target = $region16
      $region15: #{tpu_custom_call.1} parent=5 // pred_region
        // Predicated region
        $region17: #{tpu_custom_call.1} parent=15 // pred_check
          %p180 = pneg %p65
        $region18: #{tpu_custom_call.1} parent=15 // pred_check_branch
          %182 = sbr.rel (%p180) target = $region20
        $region19: #{tpu_custom_call.1} parent=15 // pred_region
          %s183 = sand.u32 %s55, 1
          %s184 = scalar_lea.sflag [#allocation3], %s183
          %s185 = sand.u32 %s55, 1
          %s186 = smul.addr %s185, 64
          %s187 = scalar_lea.vmem [#allocation2], %s186
          %s188 = smul.u32 2, %s30
          %190 = vsyncadd %s184, 0
          %s191 = sadd.s32 %s31, %s188
          %s192 = smul.addr %s29, 8
          %s193 = sadd.s32 %s191, %s192
          %s194 = smul.addr %s193, 8
          %s195 = scalar_lea.hbm %s0, %s194
          %s196 = sshll.u32 %s195, 4
          %s197 = int_to_ptr.hbm [resolvable:$true] %s196
          %s198 = sshll.u32 %s187, 4
          %s199 = int_to_ptr.vmem [resolvable:$true] %s198
          %204 = dma.hbm_to_vmem [thread:$0]  %s197, 1024, %s199, %s184, 128, 128, 8
        $region20: #{tpu_custom_call.1} parent=15 // pred_fallthru
          _
        // Predicated region
        $region21: #{tpu_custom_call.1} parent=15 // pred_check
          %p205 = pneg %p95
        $region22: #{tpu_custom_call.1} parent=15 // pred_check_branch
          %207 = sbr.rel (%p205) target = $region24
        $region23: #{tpu_custom_call.1} parent=15 // pred_region
          %s208 = sand.u32 %s85, 1
          %s209 = scalar_lea.sflag [#allocation6], %s208
          %s210 = sand.u32 %s85, 1
          %s211 = smul.addr %s210, 16
          %s212 = scalar_lea.vmem [#allocation5], %s211
          %s213 = smul.u32 2, %s30
          %215 = vsyncadd %s209, 0
          %s216 = sadd.s32 %s31, %s213
          %s217 = smul.addr %s29, 2
          %s218 = sadd.s32 %s216, %s217
          %s219 = smul.addr %s218, 8
          %s220 = scalar_lea.hbm %s1, %s219
          %s221 = sshll.u32 %s220, 4
          %s222 = int_to_ptr.hbm [resolvable:$true] %s221
          %s223 = sshll.u32 %s212, 4
          %s224 = int_to_ptr.vmem [resolvable:$true] %s223
          %229 = dma.hbm_to_vmem [thread:$0]  %s222, 256, %s224, %s209, 128, 128, 8
        $region24: #{tpu_custom_call.1} parent=15 // pred_fallthru
          _
      $region16: #{tpu_custom_call.1} parent=5 // pred_fallthru
        _
      %p230 = scmp.le.s32.totalorder 1, %s22
      %p231 = scmp.lt.s32.totalorder %s22, 3
      %p232 = pnand %p230, %p231
      %p233 = pneg %p232
      // Predicated region
      $region25: #{tpu_custom_call.1} parent=5 // pred_check
        _
      $region26: #{tpu_custom_call.1} parent=5 // pred_check_branch
        %235 = sbr.rel (%p232) target = $region28
      $region27: #{tpu_custom_call.1} parent=5 // pred_region
        %s236 = ssub.s32 %s22, 1
        %s237 = sand.u32 %s58, 1
        %s238 = scalar_lea.sflag [#allocation3], %s237
        %s239 = sand.u32 %s58, 1
        %s240 = smul.addr %s239, 64
        %s241 = scalar_lea.vmem [#allocation2], %s240
        // Predicated region
        $region29: #{tpu_custom_call.1} parent=27 // pred_check
          %p242 = pneg %p71
        $region30: #{tpu_custom_call.1} parent=27 // pred_check_branch
          %244 = sbr.rel (%p242) target = $region32
        $region31: #{tpu_custom_call.1} parent=27 // pred_region
          %246 = dma.done %s238, 1024
        $region32: #{tpu_custom_call.1} parent=27 // pred_fallthru
          _
        %s247 = sand.u32 %s88, 1
        %s248 = scalar_lea.sflag [#allocation6], %s247
        %s249 = sand.u32 %s88, 1
        %s250 = smul.addr %s249, 16
        %s251 = scalar_lea.vmem [#allocation5], %s250
        // Predicated region
        $region33: #{tpu_custom_call.1} parent=27 // pred_check
          %p252 = pneg %p101
        $region34: #{tpu_custom_call.1} parent=27 // pred_check_branch
          %254 = sbr.rel (%p252) target = $region36
        $region35: #{tpu_custom_call.1} parent=27 // pred_region
          %256 = dma.done %s248, 256
        $region36: #{tpu_custom_call.1} parent=27 // pred_fallthru
          _
        %s257 = sand.u32 %s58, 1
        %s258 = scalar_lea.sflag [#allocation3], %s257
        %s259 = sand.u32 %s58, 1
        %s260 = smul.addr %s259, 64
        %s261 = scalar_lea.vmem [#allocation2], %s260
        %p262 = pneg %p71
        %p263 = pneg %p68
        %s264 = sand.u32 %s88, 1
        %s265 = scalar_lea.sflag [#allocation6], %s264
        %s266 = sand.u32 %s88, 1
        %s267 = smul.addr %s266, 16
        %s268 = scalar_lea.vmem [#allocation5], %s267
        %p269 = pneg %p101
        %p270 = pneg %p98
        %p271 = pneg %p131
        %p272 = pneg %p128
        %s273 = sand.u32 %s118, 1
        %s274 = scalar_lea.sflag [#allocation4], %s273
        %s275 = sand.u32 %s118, 1
        %s276 = smul.addr %s275, 64
        %s277 = scalar_lea.vmem [#allocation7], %s276
        %p278 = pneg %p161
        %p279 = pneg %p158
        %s280 = sand.u32 %s148, 1
        %s281 = scalar_lea.sflag [#allocation9], %s280
        %s282 = sand.u32 %s148, 1
        %s283 = smul.addr %s282, 16
        %s284 = scalar_lea.vmem [#allocation8], %s283
        %s285 = smul.u32 2, %s33
        %s286 = smul.u32 2, %s33
        %s287 = smul.u32 2, %s33
        %s288 = smul.u32 2, %s33
        %v289 = vld [vmem:[%s251] sm:$0xff]
        %v290 = vld [vmem:[%s251 + $0x8] sm:$0xff]
        %v291 = vld [vmem:[%s241] sm:$0xff]
        %v292 = vld [vmem:[%s241 + $0x8] sm:$0xff]
        %v293 = vmul.f32 %v291, 1.442695
        %v294 = vpow.pop %v293
        %v295 = vmul.f32 %v292, 1.442695
        %v296 = vpow.pop %v295
        %v297 = vadd.f32 %v294, 0.0
        %v298 = vadd.f32 %v296, 0.0
        %vm299 = vcmp.ge.f32.partialorder %v297, %v289
        %vm300 = vcmp.ge.f32.partialorder %v298, %v290
        %v301 = vsel %vm299, 0.0, -inf
        %v302 = vsel %vm300, 0.0, -inf
        %vm303 = vcmask 130048
        %304 = vst.msk [vmem:[%s277] sm:$0xff] %vm303, %v301
        %305 = vst.msk [vmem:[%s277 + $0x8] sm:$0xff] %vm303, %v302
        %v306 = vsel %vm299, %v291, 0.0
        %v307 = vsel %vm300, %v292, 0.0
        %v308 = vadd.f32 %v306, 0.0
        %v309 = vadd.f32 %v307, 0.0
        %s310 = scalar_lea.vmem %s241, 16 [#allocation2]
        %v311 = vld [vmem:[%s310] sm:$0xff]
        %v312 = vld [vmem:[%s310 + $0x8] sm:$0xff]
        %v313 = vmul.f32 %v311, 1.442695
        %v314 = vpow.pop %v313
        %v315 = vmul.f32 %v312, 1.442695
        %v316 = vpow.pop %v315
        %v317 = vadd.f32 %v297, %v314
        %v318 = vadd.f32 %v298, %v316
        %vm319 = vcmp.ge.f32.partialorder %v317, %v289
        %vm320 = vcmp.ge.f32.partialorder %v318, %v290
        %vm321 = vmxor %vm319, %vm299
        %vm322 = vmxor %vm320, %vm300
        %v323 = vsel %vm321, 0.0, -inf
        %v324 = vsel %vm322, 0.0, -inf
        %s325 = scalar_lea.vmem %s277, 16 [#allocation7]
        %326 = vst.msk [vmem:[%s325] sm:$0xff] %vm303, %v323
        %327 = vst.msk [vmem:[%s325 + $0x8] sm:$0xff] %vm303, %v324
        %v328 = vsel %vm321, %v311, 0.0
        %v329 = vsel %vm322, %v312, 0.0
        %v330 = vadd.f32 %v308, %v328
        %v331 = vadd.f32 %v309, %v329
        %s332 = scalar_lea.vmem %s241, 32 [#allocation2]
        %v333 = vld [vmem:[%s332] sm:$0xff]
        %v334 = vld [vmem:[%s332 + $0x8] sm:$0xff]
        %v335 = vmul.f32 %v333, 1.442695
        %v336 = vpow.pop %v335
        %v337 = vmul.f32 %v334, 1.442695
        %v338 = vpow.pop %v337
        %v339 = vadd.f32 %v317, %v336
        %v340 = vadd.f32 %v318, %v338
        %vm341 = vcmp.ge.f32.partialorder %v339, %v289
        %vm342 = vcmp.ge.f32.partialorder %v340, %v290
        %vm343 = vmxor %vm341, %vm319
        %vm344 = vmxor %vm342, %vm320
        %v345 = vsel %vm343, 0.0, -inf
        %v346 = vsel %vm344, 0.0, -inf
        %s347 = scalar_lea.vmem %s277, 32 [#allocation7]
        %348 = vst.msk [vmem:[%s347] sm:$0xff] %vm303, %v345
        %349 = vst.msk [vmem:[%s347 + $0x8] sm:$0xff] %vm303, %v346
        %v350 = vsel %vm343, %v333, 0.0
        %v351 = vsel %vm344, %v334, 0.0
        %v352 = vadd.f32 %v330, %v350
        %v353 = vadd.f32 %v331, %v351
        %s354 = scalar_lea.vmem %s241, 48 [#allocation2]
        %v355 = vld [vmem:[%s354] sm:$0xff]
        %v356 = vld [vmem:[%s354 + $0x8] sm:$0xff]
        %vm357 = vmxor %vm341, 1
        %vm358 = vmxor %vm342, 1
        %v359 = vsel %vm357, 0.0, -inf
        %v360 = vsel %vm358, 0.0, -inf
        %s361 = scalar_lea.vmem %s277, 48 [#allocation7]
        %362 = vst.msk [vmem:[%s361] sm:$0xff] %vm303, %v359
        %363 = vst.msk [vmem:[%s361 + $0x8] sm:$0xff] %vm303, %v360
        %v364 = vsel %vm357, %v355, 0.0
        %v365 = vsel %vm358, %v356, 0.0
        %v366 = vadd.f32 %v352, %v364
        %v367 = vadd.f32 %v353, %v365
        %368 = vst.msk [vmem:[%s284] sm:$0xff] %vm303, %v366
        %369 = vst.msk [vmem:[%s284 + $0x8] sm:$0xff] %vm303, %v367
        %s370 = sand.u32 %s118, 1
        %s371 = scalar_lea.sflag [#allocation4], %s370
        %s372 = sand.u32 %s118, 1
        %s373 = smul.addr %s372, 64
        %s374 = scalar_lea.vmem [#allocation7], %s373
        %s375 = sand.u32 %s148, 1
        %s376 = scalar_lea.sflag [#allocation9], %s375
        %s377 = sand.u32 %s148, 1
        %s378 = smul.addr %s377, 16
        %s379 = scalar_lea.vmem [#allocation8], %s378
        // Predicated region
        $region37: #{tpu_custom_call.1} parent=27 // pred_check
          %p380 = pneg %p128
        $region38: #{tpu_custom_call.1} parent=27 // pred_check_branch
          %382 = sbr.rel (%p380) target = $region40
        $region39: #{tpu_custom_call.1} parent=27 // pred_region
          %s383 = smul.u32 2, %s33
          %385 = vsyncadd %s371, 0
          %s386 = sadd.s32 %s34, %s383
          %s387 = smul.addr %s32, 8
          %s388 = sadd.s32 %s386, %s387
          %s389 = smul.addr %s388, 8
          %s390 = scalar_lea.hbm %s2, %s389
          %s391 = sshll.u32 %s374, 4
          %s392 = int_to_ptr.vmem [resolvable:$true] %s391
          %s393 = sshll.u32 %s390, 4
          %s394 = int_to_ptr.hbm [resolvable:$true] %s393
          %399 = dma.vmem_to_hbm [thread:$0]  %s392, 1024, %s394, %s371, 128, 128, 8
        $region40: #{tpu_custom_call.1} parent=27 // pred_fallthru
          _
        // Predicated region
        $region41: #{tpu_custom_call.1} parent=27 // pred_check
          %p400 = pneg %p158
        $region42: #{tpu_custom_call.1} parent=27 // pred_check_branch
          %402 = sbr.rel (%p400) target = $region44
        $region43: #{tpu_custom_call.1} parent=27 // pred_region
          %s403 = smul.u32 2, %s33
          %405 = vsyncadd %s376, 0
          %s406 = sadd.s32 %s34, %s403
          %s407 = smul.addr %s32, 2
          %s408 = sadd.s32 %s406, %s407
          %s409 = smul.addr %s408, 8
          %s410 = scalar_lea.hbm %s3, %s409
          %s411 = sshll.u32 %s379, 4
          %s412 = int_to_ptr.vmem [resolvable:$true] %s411
          %s413 = sshll.u32 %s410, 4
          %s414 = int_to_ptr.hbm [resolvable:$true] %s413
          %419 = dma.vmem_to_hbm [thread:$0]  %s412, 256, %s414, %s376, 128, 128, 8
        $region44: #{tpu_custom_call.1} parent=27 // pred_fallthru
          _
      $region28: #{tpu_custom_call.1} parent=5 // pred_fallthru
        _
      %p420 = scmp.le.s32.totalorder 2, %s22
      // Predicated region
      $region45: #{tpu_custom_call.1} parent=5 // pred_check
        %p421 = pneg %p420
      $region46: #{tpu_custom_call.1} parent=5 // pred_check_branch
        %423 = sbr.rel (%p421) target = $region48
      $region47: #{tpu_custom_call.1} parent=5 // pred_region
        %s424 = ssub.s32 %s22, 2
        // Predicated region
        $region49: #{tpu_custom_call.1} parent=47 // pred_check
          %p425 = pneg %p134
        $region50: #{tpu_custom_call.1} parent=47 // pred_check_branch
          %427 = sbr.rel (%p425) target = $region52
        $region51: #{tpu_custom_call.1} parent=47 // pred_region
          %s428 = sand.u32 %s119, 1
          %s429 = scalar_lea.sflag [#allocation4], %s428
          %s430 = sand.u32 %s119, 1
          %s431 = smul.addr %s430, 64
          %s432 = scalar_lea.vmem [#allocation7], %s431
          %434 = dma.done %s429, 1024
        $region52: #{tpu_custom_call.1} parent=47 // pred_fallthru
          _
        // Predicated region
        $region53: #{tpu_custom_call.1} parent=47 // pred_check
          %p435 = pneg %p164
        $region54: #{tpu_custom_call.1} parent=47 // pred_check_branch
          %437 = sbr.rel (%p435) target = $region56
        $region55: #{tpu_custom_call.1} parent=47 // pred_region
          %s438 = sand.u32 %s149, 1
          %s439 = scalar_lea.sflag [#allocation9], %s438
          %s440 = sand.u32 %s149, 1
          %s441 = smul.addr %s440, 16
          %s442 = scalar_lea.vmem [#allocation8], %s441
          %444 = dma.done %s439, 256
        $region56: #{tpu_custom_call.1} parent=47 // pred_fallthru
          _
      $region48: #{tpu_custom_call.1} parent=5 // pred_fallthru
        _
    $region6: #{tpu_custom_call.1} parent=1 // loop_footer
      %s26 = sadd.s32 1, %s22
    $region7: #{tpu_custom_call.1} parent=1 // loop_footer_branch
      %21 = sbr.rel target = $region3
    $region8: #{tpu_custom_call.1} parent=1 // loop_exit
      _
    %445 = vsyncpa [#allocation3], 1
    %s446 = scalar_lea.sflag [#allocation3], 1
    %447 = vsyncpa %s446, 1
    %448 = vsyncpa [#allocation6], 1
    %s449 = scalar_lea.sflag [#allocation6], 1
    %450 = vsyncpa %s449, 1
    %451 = vsyncpa [#allocation4], 1
    %s452 = scalar_lea.sflag [#allocation4], 1
    %453 = vsyncpa %s452, 1
    %454 = vsyncpa [#allocation9], 1
    %s455 = scalar_lea.sflag [#allocation9], 1
    %456 = vsyncpa %s455, 1

</llo_original>
